<compile_context>
chip_gen: v6e
topology: v6e:2x2x1
jax: 0.10.0
libtpu: 0.0.40
codegen_flags: <defaults>
</compile_context>

<pallas_src>
import functools

import jax
import jax.numpy as jnp
from jax.experimental import pallas as pl
from jax.experimental.pallas import tpu as pltpu


def _round_up(x, m):
    return ((x + m - 1) // m) * m


def _attentive_pooling_kernel(x_ref, mask_ref, w1_ref, b1_ref, w2_ref, b2_ref,
                              wm_ref, bm_ref, out_ref, *, act_dtype,
                              approx_recip):
    x = x_ref[...]                                   # (TB, Sp, H)  compute dtype
    mask = mask_ref[...]                             # (TB, Sp)     f32
    w1 = w1_ref[...]                                 # (H, H)       compute dtype
    b1 = b1_ref[...]                                 # (1, H)       f32
    w2 = w2_ref[...]                                 # (1, H)       f32
    b2 = b2_ref[0, 0]                                # scalar       f32 (SMEM)
    wm = wm_ref[...]                                 # (H, O_pad)   compute dtype
    bm = bm_ref[...]                                 # (1, O_pad)   f32
    TB, S, H = x.shape

    # Linear(H->H): one dense MXU matmul with f32 accumulation.  The reshape
    # only merges the leading (sub-lane) dims; the lane dim H is untouched and
    # S is padded to a sublane multiple in the wrapper.
    hacc = jnp.dot(x.reshape(TB * S, H), w1,
                   preferred_element_type=jnp.float32)            # (TB*S, H)
    # tanh runs in the compute dtype (bf16 on v6e/v7x halves the largest
    # transcendental; on v5e Mosaic casts around it, still correct).
    h = jnp.tanh((hacc + b1).astype(act_dtype)).reshape(TB, S, H)

    # Linear(H->1): VPU multiply + lane reduction in f32 (keeps the MXU free;
    # avoids a lane-sparse (TB*S, 1) result and its relayout).
    e = jnp.sum(h.astype(jnp.float32) * w2[None, :, :], axis=-1) + b2  # (TB,S)

    # Masked softmax logits.  Flash-style epilogue: keep the unnormalized
    # weights p and fold 1/sum(p) into the pooled vector afterwards.
    e = jnp.where(mask > 0.0, e, -1e30)
    e_max = jnp.max(e, axis=1, keepdims=True)
    p = jnp.exp(e - e_max)                                        # (TB, Sp) f32
    l = jnp.sum(p, axis=1, keepdims=True)                         # (TB, 1)  f32

    # bmm(p[:,None,:], x) as a batched M=1 MXU matvec (MXU has slack here; this
    # removes the TB*Sp*H f32 broadcast-product temporary of the old version).
    pooled_un = jnp.einsum('bqs,bsh->bqh', p[:, None, :].astype(x.dtype), x,
                           preferred_element_type=jnp.float32)[:, 0, :]
    inv_l = pl.reciprocal(l, approx=approx_recip)                 # (TB, 1)
    pooled = pooled_un * inv_l                                    # (TB, H)  f32

    # mapping_function: Linear(H->O) + tanh.  Output lanes are padded to a
    # multiple of 128 in the wrapper -> unmasked lane-dense store.
    out = jnp.tanh(jnp.dot(pooled.astype(wm.dtype), wm,
                           preferred_element_type=jnp.float32) + bm)
    out_ref[...] = out.astype(out_ref.dtype)


def encoder2decoder_pooling(encodings, mask, params, *, batch_block=None,
                            compute_dtype=jnp.float32):
    """Attentive-pooling bridge: (B, S, H) encodings + (B, S) mask -> (B, O) h0."""
    B, S, H = encodings.shape
    O = params['wm'].shape[1]
    cd = jnp.dtype(compute_dtype)
    cd_bytes = cd.itemsize
    is_bf16 = cd == jnp.dtype(jnp.bfloat16)

    # Lane-dense output: pad O to a multiple of 128; slice after the call.
    O_pad = _round_up(O, 128)
    wm = params['wm'].astype(compute_dtype)
    bm = params['bm'].reshape(1, O).astype(jnp.float32)
    if O_pad != O:
        wm = jnp.pad(wm, ((0, 0), (0, O_pad - O)))
        bm = jnp.pad(bm, ((0, 0), (0, O_pad - O)))

    # Pad S to a sublane multiple (16 for packed bf16, 8 for f32); padded rows
    # carry mask=0 and get softmax weight 0.
    s_mult = 16 if is_bf16 else 8
    Sp = _round_up(S, s_mult)
    x = encodings.astype(compute_dtype)
    m = mask.astype(jnp.float32)
    if Sp != S:
        x = jnp.pad(x, ((0, 0), (0, Sp - S), (0, 0)))
        m = jnp.pad(m, ((0, 0), (0, Sp - S)))

    # VMEM budget: query the chip (64 MiB/TC on v7x, 128 MiB on v5e/v6e);
    # conservative fallback if the query is unavailable.
    try:
        vmem_cap = int(pltpu.get_tpu_info().vmem_capacity_bytes)
    except Exception:  # noqa: BLE001 - any failure -> conservative v7x cap
        vmem_cap = 64 * 1024 * 1024
    vmem_budget = min(int(vmem_cap * 0.70), 96 * 1024 * 1024)

    # Batch tile: largest multiple of 8 whose double-buffered blocks plus f32
    # intermediates fit the budget; keep >=2 grid steps when possible so the
    # "parallel" batch axis can split across the two v7x TensorCores.
    weight_bytes = 2 * (H * H * cd_bytes + H * O_pad * cd_bytes
                        + 3 * H * 4 + O_pad * 4) + 4096
    per_row = (2 * Sp * H * cd_bytes          # x double-buffer
               + 2 * Sp * 4                   # mask double-buffer
               + 2 * O_pad * 4                # out double-buffer
               + Sp * H * 4                   # f32 matmul accumulator
               + Sp * H * cd_bytes            # activated h
               + Sp * H * 4                   # f32 temp for the w2 reduce
               + 8 * Sp * 4 + 4 * H * 4)      # e/p/l/pooled temporaries
    Bp8 = _round_up(B, 8)
    if batch_block is None:
        avail = max(vmem_budget - weight_bytes, 8 * per_row)
        TB = max(8, min(256, (avail // per_row) // 8 * 8))
        TB = min(TB, Bp8)
        if pl.cdiv(Bp8, TB) == 1 and Bp8 > 8:
            TB = _round_up(pl.cdiv(Bp8, 2), 8)   # >=2 steps for megacore
    else:
        TB = batch_block
    Bp = pl.cdiv(B, TB) * TB
    if Bp != B:
        x = jnp.pad(x, ((0, Bp - B), (0, 0), (0, 0)))
        m = jnp.pad(m, ((0, Bp - B), (0, 0)))

    w1 = params['w1'].astype(compute_dtype)           # MXU operand
    b1 = params['b1'].reshape(1, H).astype(jnp.float32)
    w2 = params['w2'].reshape(1, H).astype(jnp.float32)  # column vector as row
    b2 = params['b2'].reshape(1, 1).astype(jnp.float32)

    n_steps = Bp // TB
    vmem_limit = int(min(vmem_cap,
                         max(32 * 1024 * 1024,
                             weight_bytes + TB * per_row + (4 << 20))))

    cost = pl.CostEstimate(
        flops=int(2 * Bp * Sp * H * H + 4 * Bp * Sp * H + 2 * Bp * H * O_pad),
        transcendentals=int(Bp * Sp * H + Bp * Sp + Bp * O_pad),
        bytes_accessed=int(Bp * Sp * H * cd_bytes + Bp * Sp * 4
                           + (H * H + H * O_pad) * cd_bytes
                           + Bp * O_pad * 4))

    kernel = functools.partial(_attentive_pooling_kernel,
                               act_dtype=compute_dtype,
                               approx_recip=is_bf16)

    out = pl.pallas_call(
        kernel,
        out_shape=jax.ShapeDtypeStruct((Bp, O_pad), jnp.float32),
        grid=(n_steps,),
        in_specs=[
            pl.BlockSpec((TB, Sp, H), lambda i: (i, 0, 0)),   # x (batch-pipelined)
            pl.BlockSpec((TB, Sp), lambda i: (i, 0)),         # mask
            pl.BlockSpec((H, H), lambda i: (0, 0)),           # W1 (resident)
            pl.BlockSpec((1, H), lambda i: (0, 0)),           # b1
            pl.BlockSpec((1, H), lambda i: (0, 0)),           # w2 row
            pl.BlockSpec(memory_space=pltpu.MemorySpace.SMEM),  # b2 scalar
            pl.BlockSpec((H, O_pad), lambda i: (0, 0)),       # Wm (padded lanes)
            pl.BlockSpec((1, O_pad), lambda i: (0, 0)),       # bm
        ],
        out_specs=pl.BlockSpec((TB, O_pad), lambda i: (i, 0)),
        compiler_params=pltpu.CompilerParams(
            dimension_semantics=("parallel",),
            vmem_limit_bytes=vmem_limit),
        cost_estimate=cost,
    )(x, m, w1, b1, w2, b2, wm, bm)
    return out[:B, :O]


def reference_pooling(encodings, mask, params):
    """Plain-JAX reference of PyTorch PoolingFunction('attentive-pooling')."""
    hp = jax.lax.Precision.HIGHEST
    h = jnp.tanh(jnp.einsum('bsh,hk->bsk', encodings, params['w1'],
                            precision=hp) + params['b1'])
    e = (jnp.einsum('bsh,ho->bso', h, params['w2'], precision=hp)
         + params['b2'])[..., 0]
    e = e + (1.0 - mask) * (-1e20)
    a = jax.nn.softmax(e, axis=1)
    pooled = jnp.einsum('bs,bsh->bh', a, encodings, precision=hp)
    return jnp.tanh(jnp.einsum('bh,ho->bo', pooled, params['wm'],
                               precision=hp) + params['bm'])


def init_params(key, gnn_hidden, lstm_hidden):
    k1, k2, k3, k4, k5, k6 = jax.random.split(key, 6)
    scale = 1.0 / jnp.sqrt(gnn_hidden)
    return {
        'w1': jax.random.normal(k1, (gnn_hidden, gnn_hidden), jnp.float32) * scale,
        'b1': jax.random.normal(k4, (1, gnn_hidden), jnp.float32) * 0.1,
        'w2': jax.random.normal(k2, (gnn_hidden, 1), jnp.float32) * scale,
        'b2': jax.random.normal(k5, (1, 1), jnp.float32) * 0.1,
        'wm': jax.random.normal(k3, (gnn_hidden, lstm_hidden), jnp.float32) * scale,
        'bm': jax.random.normal(k6, (1, lstm_hidden), jnp.float32) * 0.1,
    }


def _make_inputs(key, B, S, H, O):
    k_enc, k_len, k_par = jax.random.split(key, 3)
    enc = jax.random.normal(k_enc, (B, S, H), jnp.float32)
    lengths = jax.random.randint(k_len, (B,), max(1, S // 2), S + 1)
    msk = (jnp.arange(S)[None, :] < lengths[:, None]).astype(jnp.float32)
    params = init_params(k_par, H, O)
    return enc, msk, params


if __name__ == "__main__":
    root = jax.random.PRNGKey(0)
    k_small, k_big = jax.random.split(root)

    # Toy shapes consistent with the module: B=2 examples, 8 graph nodes
    # (question + table + column), gnn_hidden=32, lstm_hidden=64.
    enc, msk, params = _make_inputs(k_small, 2, 8, 32, 64)
    ref = reference_pooling(enc, msk, params)

    # f32 path (module semantics).
    h0 = jax.block_until_ready(encoder2decoder_pooling(enc, msk, params))
    assert h0.shape == (2, 64)
    assert jnp.allclose(h0, ref, atol=1e-3, rtol=1e-3), "f32 mismatch vs reference"

    # bf16 MXU-input fast path (valid on v5e/v6e/v7x — bf16-native MXU on all;
    # softmax / mask / accumulation / rescale stay f32).
    h0_bf16 = jax.block_until_ready(
        encoder2decoder_pooling(enc, msk, params, compute_dtype=jnp.bfloat16))
    assert jnp.allclose(h0_bf16, ref, atol=1e-1, rtol=1e-1), "bf16 sanity check failed"

    # Multi-step grid path: exercises the VMEM-budgeted batch tile and the
    # >=2-step split for v7x megacore.
    enc2, msk2, params2 = _make_inputs(k_big, 20, 24, 128, 256)
    ref2 = reference_pooling(enc2, msk2, params2)
    h02 = jax.block_until_ready(encoder2decoder_pooling(enc2, msk2, params2))
    assert h02.shape == (20, 256)
    assert jnp.allclose(h02, ref2, atol=1e-3, rtol=1e-3), "multi-step f32 mismatch"

    print("KERNEL_OK")
</pallas_src>

<mosaic_0001>
module attributes {stable_mosaic.version = 11 : i64} {
  func.func @_attentive_pooling_kernel(%arg0: i32, %arg1: memref<8x8x32xf32, #tpu.memory_space<vmem>>, %arg2: memref<8x8xf32, #tpu.memory_space<vmem>>, %arg3: memref<32x32xf32, #tpu.memory_space<vmem>>, %arg4: memref<1x32xf32, #tpu.memory_space<vmem>>, %arg5: memref<1x32xf32, #tpu.memory_space<vmem>>, %arg6: memref<1x1xf32, #tpu.memory_space<smem>>, %arg7: memref<32x128xf32, #tpu.memory_space<vmem>>, %arg8: memref<1x128xf32, #tpu.memory_space<vmem>>, %arg9: memref<8x128xf32, #tpu.memory_space<vmem>>) attributes {dimension_semantics = [#tpu.dimension_semantics<parallel>], iteration_bounds = array<i64: 1>, scalar_prefetch = 0 : i64, scratch_operands = 0 : i64, tpu.core_type = #tpu.core_type<tc>, window_params = [{transform_indices = @transform_0, window_bounds = array<i64: 8, 8, 32>}, {transform_indices = @transform_1, window_bounds = array<i64: 8, 8>}, {pipeline_mode = #tpu.pipeline_mode<synchronous>, transform_indices = @transform_2, window_bounds = array<i64: 32, 32>}, {pipeline_mode = #tpu.pipeline_mode<synchronous>, transform_indices = @transform_3, window_bounds = array<i64: 1, 32>}, {pipeline_mode = #tpu.pipeline_mode<synchronous>, transform_indices = @transform_4, window_bounds = array<i64: 1, 32>}, {transform_indices = @transform_5, window_bounds = array<i64: 1, 1>}, {pipeline_mode = #tpu.pipeline_mode<synchronous>, transform_indices = @transform_6, window_bounds = array<i64: 32, 128>}, {pipeline_mode = #tpu.pipeline_mode<synchronous>, transform_indices = @transform_7, window_bounds = array<i64: 1, 128>}, {transform_indices = @transform_8, window_bounds = array<i64: 8, 128>}]} {
    %c0 = arith.constant 0 : index
    %c0_0 = arith.constant 0 : index
    %c0_1 = arith.constant 0 : index
    %0 = vector.load %arg1[%c0, %c0_0, %c0_1] : memref<8x8x32xf32, #tpu.memory_space<vmem>>, vector<8x8x32xf32>
    %c0_2 = arith.constant 0 : index
    %c0_3 = arith.constant 0 : index
    %1 = vector.load %arg2[%c0_2, %c0_3] : memref<8x8xf32, #tpu.memory_space<vmem>>, vector<8x8xf32>
    %c0_4 = arith.constant 0 : index
    %c0_5 = arith.constant 0 : index
    %2 = vector.load %arg3[%c0_4, %c0_5] : memref<32x32xf32, #tpu.memory_space<vmem>>, vector<32x32xf32>
    %c0_6 = arith.constant 0 : index
    %c0_7 = arith.constant 0 : index
    %3 = vector.load %arg4[%c0_6, %c0_7] : memref<1x32xf32, #tpu.memory_space<vmem>>, vector<1x32xf32>
    %c0_8 = arith.constant 0 : index
    %c0_9 = arith.constant 0 : index
    %4 = vector.load %arg5[%c0_8, %c0_9] : memref<1x32xf32, #tpu.memory_space<vmem>>, vector<1x32xf32>
    %c0_10 = arith.constant 0 : index
    %c0_11 = arith.constant 0 : index
    %5 = memref.load %arg6[%c0_10, %c0_11] : memref<1x1xf32, #tpu.memory_space<smem>>
    %c0_12 = arith.constant 0 : index
    %c0_13 = arith.constant 0 : index
    %6 = vector.load %arg7[%c0_12, %c0_13] : memref<32x128xf32, #tpu.memory_space<vmem>>, vector<32x128xf32>
    %c0_14 = arith.constant 0 : index
    %c0_15 = arith.constant 0 : index
    %7 = vector.load %arg8[%c0_14, %c0_15] : memref<1x128xf32, #tpu.memory_space<vmem>>, vector<1x128xf32>
    %8 = vector.shape_cast %0 : vector<8x8x32xf32> to vector<64x32xf32>
    %cst = arith.constant dense<0.000000e+00> : vector<64x32xf32>
    %9 = tpu.matmul %8, %2, %cst {dimension_numbers = #tpu.dot_dimension_numbers<[1], [0], [0], [1], [0, 0, 1, 1], [], []>} : vector<64x32xf32>, vector<32x32xf32>, vector<64x32xf32> -> vector<64x32xf32>
    %10 = vector.broadcast %3 : vector<1x32xf32> to vector<64x32xf32>
    %11 = arith.addf %9, %10 : vector<64x32xf32>
    %12 = math.tanh %11 : vector<64x32xf32>
    %13 = vector.shape_cast %12 : vector<64x32xf32> to vector<8x8x32xf32>
    %14 = vector.shape_cast %4 : vector<1x32xf32> to vector<1x1x32xf32>
    %15 = vector.broadcast %14 : vector<1x1x32xf32> to vector<8x8x32xf32>
    %16 = arith.mulf %13, %15 : vector<8x8x32xf32>
    %cst_16 = arith.constant dense<0.000000e+00> : vector<8x8xf32>
    %17 = vector.multi_reduction <add>, %16, %cst_16 [2] : vector<8x8x32xf32> to vector<8x8xf32>
    %18 = vector.broadcast %5 : f32 to vector<8x8xf32>
    %19 = arith.addf %17, %18 : vector<8x8xf32>
    %cst_17 = arith.constant 0.000000e+00 : f32
    %20 = vector.broadcast %cst_17 : f32 to vector<8x8xf32>
    %21 = arith.cmpf ogt, %1, %20 : vector<8x8xf32>
    %cst_18 = arith.constant -1.000000e+30 : f32
    %22 = vector.broadcast %cst_18 : f32 to vector<8x8xf32>
    %23 = arith.select %21, %19, %22 : vector<8x8xi1>, vector<8x8xf32>
    %cst_19 = arith.constant dense<0xFF800000> : vector<8xf32>
    %24 = vector.multi_reduction <maximumf>, %23, %cst_19 [1] : vector<8x8xf32> to vector<8xf32>
    %25 = vector.shape_cast %24 : vector<8xf32> to vector<8x1xf32>
    %26 = vector.broadcast %25 : vector<8x1xf32> to vector<8x8xf32>
    %27 = arith.subf %23, %26 : vector<8x8xf32>
    %28 = math.exp %27 : vector<8x8xf32>
    %cst_20 = arith.constant dense<0.000000e+00> : vector<8xf32>
    %29 = vector.multi_reduction <add>, %28, %cst_20 [1] : vector<8x8xf32> to vector<8xf32>
    %30 = vector.shape_cast %29 : vector<8xf32> to vector<8x1xf32>
    %31 = vector.shape_cast %28 : vector<8x8xf32> to vector<8x1x8xf32>
    "tpu.trace_start"() <{level = 10 : i32, message = "bqs,bsh->bqh"}> : () -> ()
    %cst_21 = arith.constant dense<0.000000e+00> : vector<8x1x32xf32>
    %32 = tpu.matmul %31, %0, %cst_21 {dimension_numbers = #tpu.dot_dimension_numbers<[2], [1], [1], [2], [0, 0, 0, 1, 1, 2], [0], [0]>} : vector<8x1x8xf32>, vector<8x8x32xf32>, vector<8x1x32xf32> -> vector<8x1x32xf32>
    "tpu.trace_stop"() : () -> ()
    %33 = vector.shape_cast %32 : vector<8x1x32xf32> to vector<8x32xf32>
    %34 = tpu.reciprocal %30 : vector<8x1xf32> -> vector<8x1xf32>
    %35 = vector.broadcast %34 : vector<8x1xf32> to vector<8x32xf32>
    %36 = arith.mulf %33, %35 : vector<8x32xf32>
    %cst_22 = arith.constant dense<0.000000e+00> : vector<8x128xf32>
    %37 = tpu.matmul %36, %6, %cst_22 {dimension_numbers = #tpu.dot_dimension_numbers<[1], [0], [0], [1], [0, 0, 1, 1], [], []>} : vector<8x32xf32>, vector<32x128xf32>, vector<8x128xf32> -> vector<8x128xf32>
    %38 = vector.broadcast %7 : vector<1x128xf32> to vector<8x128xf32>
    %39 = arith.addf %37, %38 : vector<8x128xf32>
    %40 = math.tanh %39 : vector<8x128xf32>
    %c0_23 = arith.constant 0 : index
    %c0_24 = arith.constant 0 : index
    %41 = vector.load %arg9[%c0_23, %c0_24] : memref<8x128xf32, #tpu.memory_space<vmem>>, vector<8x128xf32>
    tpu.vector_store %arg9[%c0_23, %c0_24], %40 {strides = array<i32>} : memref<8x128xf32, #tpu.memory_space<vmem>>, vector<8x128xf32>,
    return
  }
  func.func @transform_0(%arg0: i32) -> (i32, i32, i32) {
    %c0_i32 = arith.constant 0 : i32
    %c0_i32_0 = arith.constant 0 : i32
    %c0_i32_1 = arith.constant 0 : i32
    return %arg0, %c0_i32, %c0_i32_0 : i32, i32, i32
  }
  func.func @transform_1(%arg0: i32) -> (i32, i32) {
    %c0_i32 = arith.constant 0 : i32
    %c0_i32_0 = arith.constant 0 : i32
    return %arg0, %c0_i32 : i32, i32
  }
  func.func @transform_2(%arg0: i32) -> (i32, i32) {
    %c0_i32 = arith.constant 0 : i32
    %c0_i32_0 = arith.constant 0 : i32
    %c0_i32_1 = arith.constant 0 : i32
    return %c0_i32, %c0_i32_0 : i32, i32
  }
  func.func @transform_3(%arg0: i32) -> (i32, i32) {
    %c0_i32 = arith.constant 0 : i32
    %c0_i32_0 = arith.constant 0 : i32
    %c0_i32_1 = arith.constant 0 : i32
    return %c0_i32, %c0_i32_0 : i32, i32
  }
  func.func @transform_4(%arg0: i32) -> (i32, i32) {
    %c0_i32 = arith.constant 0 : i32
    %c0_i32_0 = arith.constant 0 : i32
    %c0_i32_1 = arith.constant 0 : i32
    return %c0_i32, %c0_i32_0 : i32, i32
  }
  func.func @transform_5(%arg0: i32) -> (i32, i32) {
    %c0_i32 = arith.constant 0 : i32
    %c0_i32_0 = arith.constant 0 : i32
    %c0_i32_1 = arith.constant 0 : i32
    return %c0_i32, %c0_i32_0 : i32, i32
  }
  func.func @transform_6(%arg0: i32) -> (i32, i32) {
    %c0_i32 = arith.constant 0 : i32
    %c0_i32_0 = arith.constant 0 : i32
    %c0_i32_1 = arith.constant 0 : i32
    return %c0_i32, %c0_i32_0 : i32, i32
  }
  func.func @transform_7(%arg0: i32) -> (i32, i32) {
    %c0_i32 = arith.constant 0 : i32
    %c0_i32_0 = arith.constant 0 : i32
    %c0_i32_1 = arith.constant 0 : i32
    return %c0_i32, %c0_i32_0 : i32, i32
  }
  func.func @transform_8(%arg0: i32) -> (i32, i32) {
    %c0_i32 = arith.constant 0 : i32
    %c0_i32_0 = arith.constant 0 : i32
    return %arg0, %c0_i32 : i32, i32
  }
}

</mosaic_0001>

<llo_original>
// kernel: tpu_custom_call.1
$region0: #{tpu_custom_call.1}
  #allocation0 [shape = 'u32[]', space=smem, size = 0x4, offset = 0x4, fixed_abs, tag = 'smem constant byte address 0x4 - core index']
  #allocation1 [shape = 'u32[144,128]{1,0:T(1,128)}', space=vmem, size = 0x12000, scoped, tag = 'internal scratch']
  #allocation2 [shape = 'f32[1,1]{1,0:T(1,128)S(6)}', space=smem, size = 0x200, scoped, tag = 'scoped memory for tpu_custom_call.1']
  %s0 = inlined_call_operand.hbm [shape: f32[8,8,32], index: 0, kind: input, shape index: {}]
  %s1 = inlined_call_operand.hbm [shape: f32[8,8], index: 1, kind: input, shape index: {}]
  %s2 = inlined_call_operand.hbm [shape: f32[32,32], index: 2, kind: input, shape index: {}]
  %s3 = inlined_call_operand.vmem [shape: f32[1,32], index: 3, kind: input, shape index: {}]
  %s4 = inlined_call_operand.vmem [shape: f32[1,32], index: 4, kind: input, shape index: {}]
  %s5 = inlined_call_operand.<no memory space> [shape: f32[1,1], index: 5, kind: input, shape index: {}]
  %s6 = inlined_call_operand.hbm [shape: f32[32,128], index: 6, kind: input, shape index: {}]
  %s7 = inlined_call_operand.vmem [shape: f32[1,128], index: 7, kind: input, shape index: {}]
  %s8 = inlined_call_operand.hbm [shape: f32[8,128], index: 8, kind: output, shape index: {}]
  %s9 = sld [smem:[#allocation0]]
  $region58: #{tpu_custom_call.1} parent=0
    _
  %s11 = ssub.s32 1, %s9
  %s12 = scalar_select 0, %s11, %s9
  %13 = sst [smem:[#allocation2]] %s5
  $region1: #{tpu_custom_call.1} parent=0
    #allocation3 [shape = 'u8[32768]{0}', space=vmem, size = 0x8000, scoped, tag = 'input window, operand 0, single buffered']
    #allocation4 [shape = 's32[1]{0}', space=sflag, size = 0x4, scoped, tag = 'scoped memory for tpu_custom_call.1']
    #allocation5 [shape = 's32[1]{0}', space=sflag, size = 0x4, scoped, tag = 'scoped memory for tpu_custom_call.1']
    #allocation6 [shape = 'u8[4096]{0}', space=vmem, size = 0x1000, scoped, tag = 'input window, operand 1, single buffered']
    #allocation7 [shape = 's32[1]{0}', space=sflag, size = 0x4, scoped, tag = 'scoped memory for tpu_custom_call.1']
    #allocation8 [shape = 'u8[16384]{0}', space=vmem, size = 0x4000, scoped, tag = 'input window, operand 2, single buffered']
    #allocation9 [shape = 'u8[16384]{0}', space=vmem, size = 0x4000, scoped, tag = 'input window, operand 6, single buffered']
    #allocation10 [shape = 's32[1]{0}', space=sflag, size = 0x4, scoped, tag = 'scoped memory for tpu_custom_call.1']
    #allocation11 [shape = 'u8[4096]{0}', space=vmem, size = 0x1000, scoped, tag = 'output window, operand 0, single buffered']
    %14 = vsyncpa [#allocation4], 0
    %15 = vsyncpa [#allocation7], 0
    %16 = vsyncpa [#allocation10], 0
    %17 = vsyncpa [#allocation5], 0
    // Predicated region
    $region2: #{tpu_custom_call.1} parent=1 // pred_check
      _
    $region3: #{tpu_custom_call.1} parent=1 // pred_check_branch
      %19 = sbr.rel (0) target = $region5
    $region4: #{tpu_custom_call.1} parent=1 // pred_region
      %s21 = ssub.s32 1024, 1024
      %22 = vsyncadd [#allocation4], %s21
      %s23 = sshll.u32 [#allocation3], 4
      %s24 = int_to_ptr.vmem [resolvable:$true] %s23
      %29 = dma.hbm_to_vmem [thread:$0]  %s0, 1024, %s24, [#allocation4], 128, 128, 8
    $region5: #{tpu_custom_call.1} parent=1 // pred_fallthru
      _
    // Predicated region
    $region6: #{tpu_custom_call.1} parent=1 // pred_check
      _
    $region7: #{tpu_custom_call.1} parent=1 // pred_check_branch
      %31 = sbr.rel (0) target = $region9
    $region8: #{tpu_custom_call.1} parent=1 // pred_region
      %s33 = ssub.s32 128, 128
      %34 = vsyncadd [#allocation7], %s33
      %s36 = sshll.u32 [#allocation6], 4
      %s37 = int_to_ptr.vmem [resolvable:$true] %s36
      %39 = dma.hbm_to_vmem [thread:$0]  %s1, 128, %s37, [#allocation7]
    $region9: #{tpu_custom_call.1} parent=1 // pred_fallthru
      _
    // Predicated region
    $region10: #{tpu_custom_call.1} parent=1 // pred_check
      _
    $region11: #{tpu_custom_call.1} parent=1 // pred_check_branch
      %41 = sbr.rel (0) target = $region13
    $region12: #{tpu_custom_call.1} parent=1 // pred_region
      %s43 = ssub.s32 512, 512
      %44 = vsyncadd [#allocation7], %s43
      %s45 = sshll.u32 [#allocation8], 4
      %s46 = int_to_ptr.vmem [resolvable:$true] %s45
      %51 = dma.hbm_to_vmem [thread:$0]  %s2, 512, %s46, [#allocation7], 128, 128, 8
    $region13: #{tpu_custom_call.1} parent=1 // pred_fallthru
      _
    // Predicated region
    $region14: #{tpu_custom_call.1} parent=1 // pred_check
      _
    $region15: #{tpu_custom_call.1} parent=1 // pred_check_branch
      %53 = sbr.rel (0) target = $region17
    $region16: #{tpu_custom_call.1} parent=1 // pred_region
      _
    $region17: #{tpu_custom_call.1} parent=1 // pred_fallthru
      _
    // Predicated region
    $region18: #{tpu_custom_call.1} parent=1 // pred_check
      _
    $region19: #{tpu_custom_call.1} parent=1 // pred_check_branch
      %55 = sbr.rel (0) target = $region21
    $region20: #{tpu_custom_call.1} parent=1 // pred_region
      _
    $region21: #{tpu_custom_call.1} parent=1 // pred_fallthru
      _
    // Predicated region
    $region22: #{tpu_custom_call.1} parent=1 // pred_check
      _
    $region23: #{tpu_custom_call.1} parent=1 // pred_check_branch
      %57 = sbr.rel (0) target = $region25
    $region24: #{tpu_custom_call.1} parent=1 // pred_region
      _
    $region25: #{tpu_custom_call.1} parent=1 // pred_fallthru
      _
    // Predicated region
    $region26: #{tpu_custom_call.1} parent=1 // pred_check
      _
    $region27: #{tpu_custom_call.1} parent=1 // pred_check_branch
      %59 = sbr.rel (0) target = $region29
    $region28: #{tpu_custom_call.1} parent=1 // pred_region
      %s61 = ssub.s32 512, 512
      %62 = vsyncadd [#allocation10], %s61
      %s63 = sshll.u32 [#allocation9], 4
      %s64 = int_to_ptr.vmem [resolvable:$true] %s63
      %69 = dma.hbm_to_vmem [thread:$0]  %s6, 512, %s64, [#allocation10], 128, 128, 8
    $region29: #{tpu_custom_call.1} parent=1 // pred_fallthru
      _
    // Predicated region
    $region30: #{tpu_custom_call.1} parent=1 // pred_check
      _
    $region31: #{tpu_custom_call.1} parent=1 // pred_check_branch
      %71 = sbr.rel (0) target = $region33
    $region32: #{tpu_custom_call.1} parent=1 // pred_region
      _
    $region33: #{tpu_custom_call.1} parent=1 // pred_fallthru
      _
    // Predicated region
    $region34: #{tpu_custom_call.1} parent=1 // pred_check
      _
    $region35: #{tpu_custom_call.1} parent=1 // pred_check_branch
      %73 = sbr.rel (0) target = $region37
    $region36: #{tpu_custom_call.1} parent=1 // pred_region
      %74 = dma.done [#allocation4], 1024
    $region37: #{tpu_custom_call.1} parent=1 // pred_fallthru
      _
    // Predicated region
    $region38: #{tpu_custom_call.1} parent=1 // pred_check
      _
    $region39: #{tpu_custom_call.1} parent=1 // pred_check_branch
      %76 = sbr.rel (0) target = $region41
    $region40: #{tpu_custom_call.1} parent=1 // pred_region
      %77 = dma.done [#allocation7], 128
    $region41: #{tpu_custom_call.1} parent=1 // pred_fallthru
      _
    // Predicated region
    $region42: #{tpu_custom_call.1} parent=1 // pred_check
      _
    $region43: #{tpu_custom_call.1} parent=1 // pred_check_branch
      %79 = sbr.rel (0) target = $region45
    $region44: #{tpu_custom_call.1} parent=1 // pred_region
      %80 = dma.done [#allocation7], 512
    $region45: #{tpu_custom_call.1} parent=1 // pred_fallthru
      _
    // Predicated region
    $region46: #{tpu_custom_call.1} parent=1 // pred_check
      _
    $region47: #{tpu_custom_call.1} parent=1 // pred_check_branch
      %82 = sbr.rel (0) target = $region49
    $region48: #{tpu_custom_call.1} parent=1 // pred_region
      %83 = dma.done [#allocation10], 512
    $region49: #{tpu_custom_call.1} parent=1 // pred_fallthru
      _
    %v84 = vld [vmem:[#allocation3] sm:$0xff]
    %v85 = vld [vmem:[#allocation3 + $0x8] sm:$0xff]
    %v86 = vld [vmem:[#allocation3 + $0x10] sm:$0xff]
    %v87 = vld [vmem:[#allocation3 + $0x18] sm:$0xff]
    %v88 = vld [vmem:[#allocation3 + $0x20] sm:$0xff]
    %v89 = vld [vmem:[#allocation3 + $0x28] sm:$0xff]
    %v90 = vld [vmem:[#allocation3 + $0x30] sm:$0xff]
    %v91 = vld [vmem:[#allocation3 + $0x38] sm:$0xff]
    %v92 = vld [vmem:[#allocation6] sm:$0xff]
    %v93 = vld [vmem:[#allocation8] sm:$0xff]
    %v94 = vld [vmem:[#allocation8 + $0x8] sm:$0xff]
    %v95 = vld [vmem:[#allocation8 + $0x10] sm:$0xff]
    %v96 = vld [vmem:[#allocation8 + $0x18] sm:$0xff]
    %v97 = vld [vmem:[%s3] sm:$0x1]
    %v98 = vld [vmem:[%s4] sm:$0x1]
    %s99 = sld [smem:[#allocation2]]
    %v100 = vld [vmem:[#allocation9] sm:$0xff]
    %v101 = vld [vmem:[#allocation9 + $0x8] sm:$0xff]
    %v102 = vld [vmem:[#allocation9 + $0x10] sm:$0xff]
    %v103 = vld [vmem:[#allocation9 + $0x18] sm:$0xff]
    %v104 = vld [vmem:[%s7] sm:$0x1]
    %v106 = vlaneseq
    %v107 = vshrl.u32 %v106, 7
    %v108 = vsub.s32 0, %v107
    %v109 = vrot.slane %v97, %v108
    %vm111 = vcmask 261120
    %v113 = vsel %vm111, %v84, 0
    %v116 = vsel %vm111, %v85, 0
    %v119 = vsel %vm111, %v86, 0
    %v122 = vsel %vm111, %v87, 0
    %v125 = vsel %vm111, %v88, 0
    %v128 = vsel %vm111, %v89, 0
    %v131 = vsel %vm111, %v90, 0
    %v134 = vsel %vm111, %v91, 0
    %136 = vmatprep.subr.mxu0 0.0
    %137 = vmatpush1.msra.mxu0 0.0
    %138 = vmatprep.subr.mxu0 0.0
    %139 = vmatpush1.msra.mxu0 0.0
    %140 = vmatprep.subr.mxu0 0.0
    %141 = vmatpush1.msra.mxu0 0.0
    %142 = vmatprep.subr.mxu0 0.0
    %143 = vmatpush1.msra.mxu0 0.0
    %144 = vmatprep.subr.mxu0 0.0
    %145 = vmatpush1.msra.mxu0 0.0
    %146 = vmatprep.subr.mxu0 0.0
    %147 = vmatpush1.msra.mxu0 0.0
    %148 = vmatprep.subr.mxu0 0.0
    %149 = vmatpush1.msra.mxu0 0.0
    %150 = vmatprep.subr.mxu0 0.0
    %151 = vmatpush1.msra.mxu0 0.0
    %152 = vmatprep.subr.mxu0 0.0
    %153 = vmatpush1.msra.mxu0 0.0
    %154 = vmatprep.subr.mxu0 0.0
    %155 = vmatpush1.msra.mxu0 0.0
    %156 = vmatprep.subr.mxu0 0.0
    %157 = vmatpush1.msra.mxu0 0.0
    %158 = vmatprep.subr.mxu0 0.0
    %159 = vmatpush1.msra.mxu0 0.0
    %160 = vmatprep.subr.mxu0 0.0
    %161 = vmatpush1.msra.mxu0 %v96
    %162 = vmatprep.subr.mxu0 0.0
    %163 = vmatpush1.msra.mxu0 %v95
    %164 = vmatprep.subr.mxu0 0.0
    %165 = vmatpush1.msra.mxu0 %v94
    %166 = vmatprep.subr.mxu0 0.0
    %167 = vmatpush1.msra.mxu0 %v93
    %168 = vmatprep.subr.mxu0 0.0
    %169 = vmatpush2.msra.mxu0 0.0
    %170 = vmatprep.subr.mxu0 0.0
    %171 = vmatpush2.msra.mxu0 0.0
    %172 = vmatprep.subr.mxu0 0.0
    %173 = vmatpush2.msra.mxu0 0.0
    %174 = vmatprep.subr.mxu0 0.0
    %175 = vmatpush2.msra.mxu0 0.0
    %176 = vmatprep.subr.mxu0 0.0
    %177 = vmatpush2.msra.mxu0 0.0
    %178 = vmatprep.subr.mxu0 0.0
    %179 = vmatpush2.msra.mxu0 0.0
    %180 = vmatprep.subr.mxu0 0.0
    %181 = vmatpush2.msra.mxu0 0.0
    %182 = vmatprep.subr.mxu0 0.0
    %183 = vmatpush2.msra.mxu0 0.0
    %184 = vmatprep.subr.mxu0 0.0
    %185 = vmatpush2.msra.mxu0 0.0
    %186 = vmatprep.subr.mxu0 0.0
    %187 = vmatpush2.msra.mxu0 0.0
    %188 = vmatprep.subr.mxu0 0.0
    %189 = vmatpush2.msra.mxu0 0.0
    %190 = vmatprep.subr.mxu0 0.0
    %191 = vmatpush2.msra.mxu0 0.0
    %192 = vmatprep.subr.mxu0 0.0
    %193 = vmatpush2.msra.mxu0 0.0
    %194 = vmatprep.subr.mxu0 0.0
    %195 = vmatpush2.msra.mxu0 0.0
    %196 = vmatprep.subr.mxu0 0.0
    %197 = vmatpush2.msra.mxu0 0.0
    %198 = vmatprep.subr.mxu0 0.0
    %199 = vmatpush2.msra.mxu0 0.0
    %200 = vmatprep.mubr.f32.mxu0 0.0
    %201 = vmatmul.mubr.f32.gmra.mxu0 %v113
    %v202 = vpop.f32.mrf.mxu0
    %v203 = vadd.f32 %v109, %v202
    %v204 = vpop.f32.mrf.mxu0
    %205 = vmatprep.mubr.f32.mxu0 0.0
    %206 = vmatmul.mubr.f32.gmra.mxu0 %v116
    %v207 = vpop.f32.mrf.mxu0
    %v208 = vadd.f32 %v109, %v207
    %v209 = vpop.f32.mrf.mxu0
    %210 = vmatprep.mubr.f32.mxu0 0.0
    %211 = vmatmul.mubr.f32.gmra.mxu0 %v119
    %v212 = vpop.f32.mrf.mxu0
    %v213 = vadd.f32 %v109, %v212
    %v214 = vpop.f32.mrf.mxu0
    %215 = vmatprep.mubr.f32.mxu0 0.0
    %216 = vmatmul.mubr.f32.gmra.mxu0 %v122
    %v217 = vpop.f32.mrf.mxu0
    %v218 = vadd.f32 %v109, %v217
    %v219 = vpop.f32.mrf.mxu0
    %220 = vmatprep.mubr.f32.mxu0 0.0
    %221 = vmatmul.mubr.f32.gmra.mxu0 %v125
    %v222 = vpop.f32.mrf.mxu0
    %v223 = vadd.f32 %v109, %v222
    %v224 = vpop.f32.mrf.mxu0
    %225 = vmatprep.mubr.f32.mxu0 0.0
    %226 = vmatmul.mubr.f32.gmra.mxu0 %v128
    %v227 = vpop.f32.mrf.mxu0
    %v228 = vadd.f32 %v109, %v227
    %v229 = vpop.f32.mrf.mxu0
    %230 = vmatprep.mubr.f32.mxu0 0.0
    %231 = vmatmul.mubr.f32.gmra.mxu0 %v131
    %v232 = vpop.f32.mrf.mxu0
    %v233 = vadd.f32 %v109, %v232
    %v234 = vpop.f32.mrf.mxu0
    %235 = vmatprep.mubr.f32.mxu0 0.0
    %236 = vmatmul.mubr.f32.gmra.mxu0 %v134
    %v237 = vpop.f32.mrf.mxu0
    %v238 = vadd.f32 %v109, %v237
    %v239 = vpop.f32.mrf.mxu0
    %240 = vdwg.mxu0
    %v241 = vtanh.pop %v203
    %v242 = vtanh.pop %v208
    %v243 = vtanh.pop %v213
    %v244 = vtanh.pop %v218
    %v245 = vtanh.pop %v223
    %v246 = vtanh.pop %v228
    %v247 = vtanh.pop %v233
    %v248 = vtanh.pop %v238
    %v250 = vlaneseq
    %v251 = vshrl.u32 %v250, 7
    %v252 = vsub.s32 0, %v251
    %v253 = vrot.slane %v98, %v252
    %v255 = vmul.f32 %v241, %v253
    %v256 = vmul.f32 %v242, %v253
    %v257 = vmul.f32 %v243, %v253
    %v258 = vmul.f32 %v244, %v253
    %v259 = vmul.f32 %v245, %v253
    %v260 = vmul.f32 %v246, %v253
    %v261 = vmul.f32 %v247, %v253
    %v262 = vmul.f32 %v248, %v253
    %v263 = vsel %vm111, %v255, 0.0
    %264 = vadd.xlane.f32.xlu0 %v263
    %v265 = vpop.xlane.xlu0 %264
    %v266 = vsel %vm111, %v256, 0.0
    %267 = vadd.xlane.f32.xlu0 %v266
    %v268 = vpop.xlane.xlu0 %267
    %v269 = vsel %vm111, %v257, 0.0
    %270 = vadd.xlane.f32.xlu0 %v269
    %v271 = vpop.xlane.xlu0 %270
    %v272 = vsel %vm111, %v258, 0.0
    %273 = vadd.xlane.f32.xlu0 %v272
    %v274 = vpop.xlane.xlu0 %273
    %v275 = vsel %vm111, %v259, 0.0
    %276 = vadd.xlane.f32.xlu0 %v275
    %v277 = vpop.xlane.xlu0 %276
    %v278 = vsel %vm111, %v260, 0.0
    %279 = vadd.xlane.f32.xlu0 %v278
    %v280 = vpop.xlane.xlu0 %279
    %v281 = vsel %vm111, %v261, 0.0
    %282 = vadd.xlane.f32.xlu0 %v281
    %v283 = vpop.xlane.xlu0 %282
    %v284 = vsel %vm111, %v262, 0.0
    %285 = vadd.xlane.f32.xlu0 %v284
    %v286 = vpop.xlane.xlu0 %285
    %v287 = vstv %s99
    %v288 = vadd.f32 %v265, %v287
    %v289 = vadd.f32 %v268, %v287
    %v290 = vadd.f32 %v271, %v287
    %v291 = vadd.f32 %v274, %v287
    %v292 = vadd.f32 %v277, %v287
    %v293 = vadd.f32 %v280, %v287
    %v294 = vadd.f32 %v283, %v287
    %v295 = vadd.f32 %v286, %v287
    %vm296 = vcmp.gt.f32.partialorder %v92, 0.0
    %v305 = vlaneseq
    %v306 = vand.u32 %v305, 127
    %v307 = vlaneseq
    %v308 = vshrl.u32 %v307, 7
    %v309 = vsub.s32 %v306, %v308
    %v310 = vrot.slane %v288, %v309
    %v311 = vlaneseq
    %v312 = vshrl.u32 %v311, 7
    %v313 = vsub.s32 %v306, %v312
    %v314 = vrot.slane %v289, %v313
    %v315 = vlaneseq
    %v316 = vshrl.u32 %v315, 7
    %v317 = vsub.s32 %v306, %v316
    %v318 = vrot.slane %v290, %v317
    %v319 = vlaneseq
    %v320 = vshrl.u32 %v319, 7
    %v321 = vsub.s32 %v306, %v320
    %v322 = vrot.slane %v291, %v321
    %v323 = vlaneseq
    %v324 = vshrl.u32 %v323, 7
    %v325 = vsub.s32 %v306, %v324
    %v326 = vrot.slane %v292, %v325
    %v327 = vlaneseq
    %v328 = vshrl.u32 %v327, 7
    %v329 = vsub.s32 %v306, %v328
    %v330 = vrot.slane %v293, %v329
    %v331 = vlaneseq
    %v332 = vshrl.u32 %v331, 7
    %v333 = vsub.s32 %v306, %v332
    %v334 = vrot.slane %v294, %v333
    %v335 = vlaneseq
    %v336 = vshrl.u32 %v335, 7
    %v337 = vsub.s32 %v306, %v336
    %v338 = vrot.slane %v295, %v337
    %vm339 = vcmask 1041409
    %v340 = vsel %vm339, %v314, %v310
    %vm341 = vcmask 1042434
    %v342 = vsel %vm341, %v318, %v340
    %vm343 = vcmask 1043459
    %v344 = vsel %vm343, %v322, %v342
    %vm345 = vcmask 1044484
    %v346 = vsel %vm345, %v326, %v344
    %vm347 = vcmask 1045509
    %v348 = vsel %vm347, %v330, %v346
    %vm349 = vcmask 1046534
    %v350 = vsel %vm349, %v334, %v348
    %vm351 = vcmask 1047559
    %v352 = vsel %vm351, %v338, %v350
    %v354 = vsel %vm296, %v352, -1e+30
    %vm355 = vcmask 64512
    %v356 = vsel %vm355, %v354, -inf
    %357 = vmax.xlane.f32.xlu0 %v356
    %v358 = vpop.xlane.xlu0 %357
    %v359 = vsub.f32 %v354, %v358
    %v360 = vmul.f32 %v359, 1.442695
    %v361 = vpow.pop %v360
    %v362 = vsel %vm355, %v361, 0.0
    %363 = vadd.xlane.f32.xlu0 %v362
    %v364 = vpop.xlane.xlu0 %363
    %v366 = vcombine.high %v361, %v361
    %v368 = vunpack.c.l.s4 1966171168
    %v369 = vunpack.c.0.s8 %v368
    %v370 = vlaneseq
    %v371 = vshrl.u32 %v370, 7
    %v372 = vsub.s32 %v369, %v371
    %v373 = vrot.slane %v361, %v372
    %v375 = vunpack.c.l.s4 1966171168
    %v376 = vunpack.c.0.s8 %v375
    %v377 = vlaneseq
    %v378 = vshrl.u32 %v377, 7
    %v379 = vsub.s32 %v376, %v378
    %v380 = vrot.slane %v366, %v379
    %v381 = vcombine.high %v373, %v373
    %v382 = vcombine.high %v380, %v380
    %v384 = vunpack.c.l.s4 1966171168
    %v385 = vunpack.c.0.s8 %v384
    %v386 = vlaneseq
    %v387 = vshrl.u32 %v386, 7
    %v388 = vsub.s32 %v385, %v387
    %v389 = vrot.slane %v373, %v388
    %v391 = vunpack.c.l.s4 1966171168
    %v392 = vunpack.c.0.s8 %v391
    %v393 = vlaneseq
    %v394 = vshrl.u32 %v393, 7
    %v395 = vsub.s32 %v392, %v394
    %v396 = vrot.slane %v380, %v395
    %v398 = vunpack.c.l.s4 1966171168
    %v399 = vunpack.c.0.s8 %v398
    %v400 = vlaneseq
    %v401 = vshrl.u32 %v400, 7
    %v402 = vsub.s32 %v399, %v401
    %v403 = vrot.slane %v381, %v402
    %v405 = vunpack.c.l.s4 1966171168
    %v406 = vunpack.c.0.s8 %v405
    %v407 = vlaneseq
    %v408 = vshrl.u32 %v407, 7
    %v409 = vsub.s32 %v406, %v408
    %v410 = vrot.slane %v382, %v409
    %v411 = vcombine.high %v389, %v389
    %v412 = vcombine.high %v396, %v396
    %v413 = vcombine.high %v403, %v403
    %v414 = vcombine.high %v410, %v410
    %v415 = vsel %vm355, %v389, 0
    %417 = vmatprep.subr.mxu0 0.0
    %418 = vmatpush1.msra.mxu0 0.0
    %419 = vmatprep.subr.mxu0 0.0
    %420 = vmatpush1.msra.mxu0 0.0
    %421 = vmatprep.subr.mxu0 0.0
    %422 = vmatpush1.msra.mxu0 0.0
    %423 = vmatprep.subr.mxu0 0.0
    %424 = vmatpush1.msra.mxu0 0.0
    %425 = vmatprep.subr.mxu0 0.0
    %426 = vmatpush1.msra.mxu0 0.0
    %427 = vmatprep.subr.mxu0 0.0
    %428 = vmatpush1.msra.mxu0 0.0
    %429 = vmatprep.subr.mxu0 0.0
    %430 = vmatpush1.msra.mxu0 0.0
    %431 = vmatprep.subr.mxu0 0.0
    %432 = vmatpush1.msra.mxu0 0.0
    %433 = vmatprep.subr.mxu0 0.0
    %434 = vmatpush1.msra.mxu0 0.0
    %435 = vmatprep.subr.mxu0 0.0
    %436 = vmatpush1.msra.mxu0 0.0
    %437 = vmatprep.subr.mxu0 0.0
    %438 = vmatpush1.msra.mxu0 0.0
    %439 = vmatprep.subr.mxu0 0.0
    %440 = vmatpush1.msra.mxu0 0.0
    %441 = vmatprep.subr.mxu0 0.0
    %442 = vmatpush1.msra.mxu0 0.0
    %443 = vmatprep.subr.mxu0 0.0
    %444 = vmatpush1.msra.mxu0 0.0
    %445 = vmatprep.subr.mxu0 0.0
    %446 = vmatpush1.msra.mxu0 0.0
    %447 = vmatprep.subr.mxu0 0.0
    %448 = vmatpush1.msra.mxu0 %v84
    %449 = vmatprep.subr.mxu0 0.0
    %450 = vmatpush2.msra.mxu0 0.0
    %451 = vmatprep.subr.mxu0 0.0
    %452 = vmatpush2.msra.mxu0 0.0
    %453 = vmatprep.subr.mxu0 0.0
    %454 = vmatpush2.msra.mxu0 0.0
    %455 = vmatprep.subr.mxu0 0.0
    %456 = vmatpush2.msra.mxu0 0.0
    %457 = vmatprep.subr.mxu0 0.0
    %458 = vmatpush2.msra.mxu0 0.0
    %459 = vmatprep.subr.mxu0 0.0
    %460 = vmatpush2.msra.mxu0 0.0
    %461 = vmatprep.subr.mxu0 0.0
    %462 = vmatpush2.msra.mxu0 0.0
    %463 = vmatprep.subr.mxu0 0.0
    %464 = vmatpush2.msra.mxu0 0.0
    %465 = vmatprep.subr.mxu0 0.0
    %466 = vmatpush2.msra.mxu0 0.0
    %467 = vmatprep.subr.mxu0 0.0
    %468 = vmatpush2.msra.mxu0 0.0
    %469 = vmatprep.subr.mxu0 0.0
    %470 = vmatpush2.msra.mxu0 0.0
    %471 = vmatprep.subr.mxu0 0.0
    %472 = vmatpush2.msra.mxu0 0.0
    %473 = vmatprep.subr.mxu0 0.0
    %474 = vmatpush2.msra.mxu0 0.0
    %475 = vmatprep.subr.mxu0 0.0
    %476 = vmatpush2.msra.mxu0 0.0
    %477 = vmatprep.subr.mxu0 0.0
    %478 = vmatpush2.msra.mxu0 0.0
    %479 = vmatprep.subr.mxu0 0.0
    %480 = vmatpush2.msra.mxu0 0.0
    %481 = vmatprep.mubr.f32.mxu0 0.0
    %482 = vmatmul.mubr.f32.gmra.mxu0 %v415
    %v483 = vpop.f32.mrf.mxu0
    %v484 = vadd.f32 0.0, %v483
    %v485 = vpop.f32.mrf.mxu0
    %486 = vdwg.mxu0
    %v487 = vsel %vm355, %v403, 0
    %489 = vmatprep.subr.mxu0 0.0
    %490 = vmatpush1.msra.mxu0 0.0
    %491 = vmatprep.subr.mxu0 0.0
    %492 = vmatpush1.msra.mxu0 0.0
    %493 = vmatprep.subr.mxu0 0.0
    %494 = vmatpush1.msra.mxu0 0.0
    %495 = vmatprep.subr.mxu0 0.0
    %496 = vmatpush1.msra.mxu0 0.0
    %497 = vmatprep.subr.mxu0 0.0
    %498 = vmatpush1.msra.mxu0 0.0
    %499 = vmatprep.subr.mxu0 0.0
    %500 = vmatpush1.msra.mxu0 0.0
    %501 = vmatprep.subr.mxu0 0.0
    %502 = vmatpush1.msra.mxu0 0.0
    %503 = vmatprep.subr.mxu0 0.0
    %504 = vmatpush1.msra.mxu0 0.0
    %505 = vmatprep.subr.mxu0 0.0
    %506 = vmatpush1.msra.mxu0 0.0
    %507 = vmatprep.subr.mxu0 0.0
    %508 = vmatpush1.msra.mxu0 0.0
    %509 = vmatprep.subr.mxu0 0.0
    %510 = vmatpush1.msra.mxu0 0.0
    %511 = vmatprep.subr.mxu0 0.0
    %512 = vmatpush1.msra.mxu0 0.0
    %513 = vmatprep.subr.mxu0 0.0
    %514 = vmatpush1.msra.mxu0 0.0
    %515 = vmatprep.subr.mxu0 0.0
    %516 = vmatpush1.msra.mxu0 0.0
    %517 = vmatprep.subr.mxu0 0.0
    %518 = vmatpush1.msra.mxu0 0.0
    %519 = vmatprep.subr.mxu0 0.0
    %520 = vmatpush1.msra.mxu0 %v85
    %521 = vmatprep.subr.mxu0 0.0
    %522 = vmatpush2.msra.mxu0 0.0
    %523 = vmatprep.subr.mxu0 0.0
    %524 = vmatpush2.msra.mxu0 0.0
    %525 = vmatprep.subr.mxu0 0.0
    %526 = vmatpush2.msra.mxu0 0.0
    %527 = vmatprep.subr.mxu0 0.0
    %528 = vmatpush2.msra.mxu0 0.0
    %529 = vmatprep.subr.mxu0 0.0
    %530 = vmatpush2.msra.mxu0 0.0
    %531 = vmatprep.subr.mxu0 0.0
    %532 = vmatpush2.msra.mxu0 0.0
    %533 = vmatprep.subr.mxu0 0.0
    %534 = vmatpush2.msra.mxu0 0.0
    %535 = vmatprep.subr.mxu0 0.0
    %536 = vmatpush2.msra.mxu0 0.0
    %537 = vmatprep.subr.mxu0 0.0
    %538 = vmatpush2.msra.mxu0 0.0
    %539 = vmatprep.subr.mxu0 0.0
    %540 = vmatpush2.msra.mxu0 0.0
    %541 = vmatprep.subr.mxu0 0.0
    %542 = vmatpush2.msra.mxu0 0.0
    %543 = vmatprep.subr.mxu0 0.0
    %544 = vmatpush2.msra.mxu0 0.0
    %545 = vmatprep.subr.mxu0 0.0
    %546 = vmatpush2.msra.mxu0 0.0
    %547 = vmatprep.subr.mxu0 0.0
    %548 = vmatpush2.msra.mxu0 0.0
    %549 = vmatprep.subr.mxu0 0.0
    %550 = vmatpush2.msra.mxu0 0.0
    %551 = vmatprep.subr.mxu0 0.0
    %552 = vmatpush2.msra.mxu0 0.0
    %553 = vmatprep.mubr.f32.mxu0 0.0
    %554 = vmatmul.mubr.f32.gmra.mxu0 %v487
    %v555 = vpop.f32.mrf.mxu0
    %v556 = vadd.f32 0.0, %v555
    %v557 = vpop.f32.mrf.mxu0
    %558 = vdwg.mxu0
    %v559 = vsel %vm355, %v411, 0
    %561 = vmatprep.subr.mxu0 0.0
    %562 = vmatpush1.msra.mxu0 0.0
    %563 = vmatprep.subr.mxu0 0.0
    %564 = vmatpush1.msra.mxu0 0.0
    %565 = vmatprep.subr.mxu0 0.0
    %566 = vmatpush1.msra.mxu0 0.0
    %567 = vmatprep.subr.mxu0 0.0
    %568 = vmatpush1.msra.mxu0 0.0
    %569 = vmatprep.subr.mxu0 0.0
    %570 = vmatpush1.msra.mxu0 0.0
    %571 = vmatprep.subr.mxu0 0.0
    %572 = vmatpush1.msra.mxu0 0.0
    %573 = vmatprep.subr.mxu0 0.0
    %574 = vmatpush1.msra.mxu0 0.0
    %575 = vmatprep.subr.mxu0 0.0
    %576 = vmatpush1.msra.mxu0 0.0
    %577 = vmatprep.subr.mxu0 0.0
    %578 = vmatpush1.msra.mxu0 0.0
    %579 = vmatprep.subr.mxu0 0.0
    %580 = vmatpush1.msra.mxu0 0.0
    %581 = vmatprep.subr.mxu0 0.0
    %582 = vmatpush1.msra.mxu0 0.0
    %583 = vmatprep.subr.mxu0 0.0
    %584 = vmatpush1.msra.mxu0 0.0
    %585 = vmatprep.subr.mxu0 0.0
    %586 = vmatpush1.msra.mxu0 0.0
    %587 = vmatprep.subr.mxu0 0.0
    %588 = vmatpush1.msra.mxu0 0.0
    %589 = vmatprep.subr.mxu0 0.0
    %590 = vmatpush1.msra.mxu0 0.0
    %591 = vmatprep.subr.mxu0 0.0
    %592 = vmatpush1.msra.mxu0 %v86
    %593 = vmatprep.subr.mxu0 0.0
    %594 = vmatpush2.msra.mxu0 0.0
    %595 = vmatprep.subr.mxu0 0.0
    %596 = vmatpush2.msra.mxu0 0.0
    %597 = vmatprep.subr.mxu0 0.0
    %598 = vmatpush2.msra.mxu0 0.0
    %599 = vmatprep.subr.mxu0 0.0
    %600 = vmatpush2.msra.mxu0 0.0
    %601 = vmatprep.subr.mxu0 0.0
    %602 = vmatpush2.msra.mxu0 0.0
    %603 = vmatprep.subr.mxu0 0.0
    %604 = vmatpush2.msra.mxu0 0.0
    %605 = vmatprep.subr.mxu0 0.0
    %606 = vmatpush2.msra.mxu0 0.0
    %607 = vmatprep.subr.mxu0 0.0
    %608 = vmatpush2.msra.mxu0 0.0
    %609 = vmatprep.subr.mxu0 0.0
    %610 = vmatpush2.msra.mxu0 0.0
    %611 = vmatprep.subr.mxu0 0.0
    %612 = vmatpush2.msra.mxu0 0.0
    %613 = vmatprep.subr.mxu0 0.0
    %614 = vmatpush2.msra.mxu0 0.0
    %615 = vmatprep.subr.mxu0 0.0
    %616 = vmatpush2.msra.mxu0 0.0
    %617 = vmatprep.subr.mxu0 0.0
    %618 = vmatpush2.msra.mxu0 0.0
    %619 = vmatprep.subr.mxu0 0.0
    %620 = vmatpush2.msra.mxu0 0.0
    %621 = vmatprep.subr.mxu0 0.0
    %622 = vmatpush2.msra.mxu0 0.0
    %623 = vmatprep.subr.mxu0 0.0
    %624 = vmatpush2.msra.mxu0 0.0
    %625 = vmatprep.mubr.f32.mxu0 0.0
    %626 = vmatmul.mubr.f32.gmra.mxu0 %v559
    %v627 = vpop.f32.mrf.mxu0
    %v628 = vadd.f32 0.0, %v627
    %v629 = vpop.f32.mrf.mxu0
    %630 = vdwg.mxu0
    %v631 = vsel %vm355, %v413, 0
    %633 = vmatprep.subr.mxu0 0.0
    %634 = vmatpush1.msra.mxu0 0.0
    %635 = vmatprep.subr.mxu0 0.0
    %636 = vmatpush1.msra.mxu0 0.0
    %637 = vmatprep.subr.mxu0 0.0
    %638 = vmatpush1.msra.mxu0 0.0
    %639 = vmatprep.subr.mxu0 0.0
    %640 = vmatpush1.msra.mxu0 0.0
    %641 = vmatprep.subr.mxu0 0.0
    %642 = vmatpush1.msra.mxu0 0.0
    %643 = vmatprep.subr.mxu0 0.0
    %644 = vmatpush1.msra.mxu0 0.0
    %645 = vmatprep.subr.mxu0 0.0
    %646 = vmatpush1.msra.mxu0 0.0
    %647 = vmatprep.subr.mxu0 0.0
    %648 = vmatpush1.msra.mxu0 0.0
    %649 = vmatprep.subr.mxu0 0.0
    %650 = vmatpush1.msra.mxu0 0.0
    %651 = vmatprep.subr.mxu0 0.0
    %652 = vmatpush1.msra.mxu0 0.0
    %653 = vmatprep.subr.mxu0 0.0
    %654 = vmatpush1.msra.mxu0 0.0
    %655 = vmatprep.subr.mxu0 0.0
    %656 = vmatpush1.msra.mxu0 0.0
    %657 = vmatprep.subr.mxu0 0.0
    %658 = vmatpush1.msra.mxu0 0.0
    %659 = vmatprep.subr.mxu0 0.0
    %660 = vmatpush1.msra.mxu0 0.0
    %661 = vmatprep.subr.mxu0 0.0
    %662 = vmatpush1.msra.mxu0 0.0
    %663 = vmatprep.subr.mxu0 0.0
    %664 = vmatpush1.msra.mxu0 %v87
    %665 = vmatprep.subr.mxu0 0.0
    %666 = vmatpush2.msra.mxu0 0.0
    %667 = vmatprep.subr.mxu0 0.0
    %668 = vmatpush2.msra.mxu0 0.0
    %669 = vmatprep.subr.mxu0 0.0
    %670 = vmatpush2.msra.mxu0 0.0
    %671 = vmatprep.subr.mxu0 0.0
    %672 = vmatpush2.msra.mxu0 0.0
    %673 = vmatprep.subr.mxu0 0.0
    %674 = vmatpush2.msra.mxu0 0.0
    %675 = vmatprep.subr.mxu0 0.0
    %676 = vmatpush2.msra.mxu0 0.0
    %677 = vmatprep.subr.mxu0 0.0
    %678 = vmatpush2.msra.mxu0 0.0
    %679 = vmatprep.subr.mxu0 0.0
    %680 = vmatpush2.msra.mxu0 0.0
    %681 = vmatprep.subr.mxu0 0.0
    %682 = vmatpush2.msra.mxu0 0.0
    %683 = vmatprep.subr.mxu0 0.0
    %684 = vmatpush2.msra.mxu0 0.0
    %685 = vmatprep.subr.mxu0 0.0
    %686 = vmatpush2.msra.mxu0 0.0
    %687 = vmatprep.subr.mxu0 0.0
    %688 = vmatpush2.msra.mxu0 0.0
    %689 = vmatprep.subr.mxu0 0.0
    %690 = vmatpush2.msra.mxu0 0.0
    %691 = vmatprep.subr.mxu0 0.0
    %692 = vmatpush2.msra.mxu0 0.0
    %693 = vmatprep.subr.mxu0 0.0
    %694 = vmatpush2.msra.mxu0 0.0
    %695 = vmatprep.subr.mxu0 0.0
    %696 = vmatpush2.msra.mxu0 0.0
    %697 = vmatprep.mubr.f32.mxu0 0.0
    %698 = vmatmul.mubr.f32.gmra.mxu0 %v631
    %v699 = vpop.f32.mrf.mxu0
    %v700 = vadd.f32 0.0, %v699
    %v701 = vpop.f32.mrf.mxu0
    %702 = vdwg.mxu0
    %v703 = vsel %vm355, %v396, 0
    %705 = vmatprep.subr.mxu0 0.0
    %706 = vmatpush1.msra.mxu0 0.0
    %707 = vmatprep.subr.mxu0 0.0
    %708 = vmatpush1.msra.mxu0 0.0
    %709 = vmatprep.subr.mxu0 0.0
    %710 = vmatpush1.msra.mxu0 0.0
    %711 = vmatprep.subr.mxu0 0.0
    %712 = vmatpush1.msra.mxu0 0.0
    %713 = vmatprep.subr.mxu0 0.0
    %714 = vmatpush1.msra.mxu0 0.0
    %715 = vmatprep.subr.mxu0 0.0
    %716 = vmatpush1.msra.mxu0 0.0
    %717 = vmatprep.subr.mxu0 0.0
    %718 = vmatpush1.msra.mxu0 0.0
    %719 = vmatprep.subr.mxu0 0.0
    %720 = vmatpush1.msra.mxu0 0.0
    %721 = vmatprep.subr.mxu0 0.0
    %722 = vmatpush1.msra.mxu0 0.0
    %723 = vmatprep.subr.mxu0 0.0
    %724 = vmatpush1.msra.mxu0 0.0
    %725 = vmatprep.subr.mxu0 0.0
    %726 = vmatpush1.msra.mxu0 0.0
    %727 = vmatprep.subr.mxu0 0.0
    %728 = vmatpush1.msra.mxu0 0.0
    %729 = vmatprep.subr.mxu0 0.0
    %730 = vmatpush1.msra.mxu0 0.0
    %731 = vmatprep.subr.mxu0 0.0
    %732 = vmatpush1.msra.mxu0 0.0
    %733 = vmatprep.subr.mxu0 0.0
    %734 = vmatpush1.msra.mxu0 0.0
    %735 = vmatprep.subr.mxu0 0.0
    %736 = vmatpush1.msra.mxu0 %v88
    %737 = vmatprep.subr.mxu0 0.0
    %738 = vmatpush2.msra.mxu0 0.0
    %739 = vmatprep.subr.mxu0 0.0
    %740 = vmatpush2.msra.mxu0 0.0
    %741 = vmatprep.subr.mxu0 0.0
    %742 = vmatpush2.msra.mxu0 0.0
    %743 = vmatprep.subr.mxu0 0.0
    %744 = vmatpush2.msra.mxu0 0.0
    %745 = vmatprep.subr.mxu0 0.0
    %746 = vmatpush2.msra.mxu0 0.0
    %747 = vmatprep.subr.mxu0 0.0
    %748 = vmatpush2.msra.mxu0 0.0
    %749 = vmatprep.subr.mxu0 0.0
    %750 = vmatpush2.msra.mxu0 0.0
    %751 = vmatprep.subr.mxu0 0.0
    %752 = vmatpush2.msra.mxu0 0.0
    %753 = vmatprep.subr.mxu0 0.0
    %754 = vmatpush2.msra.mxu0 0.0
    %755 = vmatprep.subr.mxu0 0.0
    %756 = vmatpush2.msra.mxu0 0.0
    %757 = vmatprep.subr.mxu0 0.0
    %758 = vmatpush2.msra.mxu0 0.0
    %759 = vmatprep.subr.mxu0 0.0
    %760 = vmatpush2.msra.mxu0 0.0
    %761 = vmatprep.subr.mxu0 0.0
    %762 = vmatpush2.msra.mxu0 0.0
    %763 = vmatprep.subr.mxu0 0.0
    %764 = vmatpush2.msra.mxu0 0.0
    %765 = vmatprep.subr.mxu0 0.0
    %766 = vmatpush2.msra.mxu0 0.0
    %767 = vmatprep.subr.mxu0 0.0
    %768 = vmatpush2.msra.mxu0 0.0
    %769 = vmatprep.mubr.f32.mxu0 0.0
    %770 = vmatmul.mubr.f32.gmra.mxu0 %v703
    %v771 = vpop.f32.mrf.mxu0
    %v772 = vadd.f32 0.0, %v771
    %v773 = vpop.f32.mrf.mxu0
    %774 = vdwg.mxu0
    %v775 = vsel %vm355, %v410, 0
    %777 = vmatprep.subr.mxu0 0.0
    %778 = vmatpush1.msra.mxu0 0.0
    %779 = vmatprep.subr.mxu0 0.0
    %780 = vmatpush1.msra.mxu0 0.0
    %781 = vmatprep.subr.mxu0 0.0
    %782 = vmatpush1.msra.mxu0 0.0
    %783 = vmatprep.subr.mxu0 0.0
    %784 = vmatpush1.msra.mxu0 0.0
    %785 = vmatprep.subr.mxu0 0.0
    %786 = vmatpush1.msra.mxu0 0.0
    %787 = vmatprep.subr.mxu0 0.0
    %788 = vmatpush1.msra.mxu0 0.0
    %789 = vmatprep.subr.mxu0 0.0
    %790 = vmatpush1.msra.mxu0 0.0
    %791 = vmatprep.subr.mxu0 0.0
    %792 = vmatpush1.msra.mxu0 0.0
    %793 = vmatprep.subr.mxu0 0.0
    %794 = vmatpush1.msra.mxu0 0.0
    %795 = vmatprep.subr.mxu0 0.0
    %796 = vmatpush1.msra.mxu0 0.0
    %797 = vmatprep.subr.mxu0 0.0
    %798 = vmatpush1.msra.mxu0 0.0
    %799 = vmatprep.subr.mxu0 0.0
    %800 = vmatpush1.msra.mxu0 0.0
    %801 = vmatprep.subr.mxu0 0.0
    %802 = vmatpush1.msra.mxu0 0.0
    %803 = vmatprep.subr.mxu0 0.0
    %804 = vmatpush1.msra.mxu0 0.0
    %805 = vmatprep.subr.mxu0 0.0
    %806 = vmatpush1.msra.mxu0 0.0
    %807 = vmatprep.subr.mxu0 0.0
    %808 = vmatpush1.msra.mxu0 %v89
    %809 = vmatprep.subr.mxu0 0.0
    %810 = vmatpush2.msra.mxu0 0.0
    %811 = vmatprep.subr.mxu0 0.0
    %812 = vmatpush2.msra.mxu0 0.0
    %813 = vmatprep.subr.mxu0 0.0
    %814 = vmatpush2.msra.mxu0 0.0
    %815 = vmatprep.subr.mxu0 0.0
    %816 = vmatpush2.msra.mxu0 0.0
    %817 = vmatprep.subr.mxu0 0.0
    %818 = vmatpush2.msra.mxu0 0.0
    %819 = vmatprep.subr.mxu0 0.0
    %820 = vmatpush2.msra.mxu0 0.0
    %821 = vmatprep.subr.mxu0 0.0
    %822 = vmatpush2.msra.mxu0 0.0
    %823 = vmatprep.subr.mxu0 0.0
    %824 = vmatpush2.msra.mxu0 0.0
    %825 = vmatprep.subr.mxu0 0.0
    %826 = vmatpush2.msra.mxu0 0.0
    %827 = vmatprep.subr.mxu0 0.0
    %828 = vmatpush2.msra.mxu0 0.0
    %829 = vmatprep.subr.mxu0 0.0
    %830 = vmatpush2.msra.mxu0 0.0
    %831 = vmatprep.subr.mxu0 0.0
    %832 = vmatpush2.msra.mxu0 0.0
    %833 = vmatprep.subr.mxu0 0.0
    %834 = vmatpush2.msra.mxu0 0.0
    %835 = vmatprep.subr.mxu0 0.0
    %836 = vmatpush2.msra.mxu0 0.0
    %837 = vmatprep.subr.mxu0 0.0
    %838 = vmatpush2.msra.mxu0 0.0
    %839 = vmatprep.subr.mxu0 0.0
    %840 = vmatpush2.msra.mxu0 0.0
    %841 = vmatprep.mubr.f32.mxu0 0.0
    %842 = vmatmul.mubr.f32.gmra.mxu0 %v775
    %v843 = vpop.f32.mrf.mxu0
    %v844 = vadd.f32 0.0, %v843
    %v845 = vpop.f32.mrf.mxu0
    %846 = vdwg.mxu0
    %v847 = vsel %vm355, %v412, 0
    %849 = vmatprep.subr.mxu0 0.0
    %850 = vmatpush1.msra.mxu0 0.0
    %851 = vmatprep.subr.mxu0 0.0
    %852 = vmatpush1.msra.mxu0 0.0
    %853 = vmatprep.subr.mxu0 0.0
    %854 = vmatpush1.msra.mxu0 0.0
    %855 = vmatprep.subr.mxu0 0.0
    %856 = vmatpush1.msra.mxu0 0.0
    %857 = vmatprep.subr.mxu0 0.0
    %858 = vmatpush1.msra.mxu0 0.0
    %859 = vmatprep.subr.mxu0 0.0
    %860 = vmatpush1.msra.mxu0 0.0
    %861 = vmatprep.subr.mxu0 0.0
    %862 = vmatpush1.msra.mxu0 0.0
    %863 = vmatprep.subr.mxu0 0.0
    %864 = vmatpush1.msra.mxu0 0.0
    %865 = vmatprep.subr.mxu0 0.0
    %866 = vmatpush1.msra.mxu0 0.0
    %867 = vmatprep.subr.mxu0 0.0
    %868 = vmatpush1.msra.mxu0 0.0
    %869 = vmatprep.subr.mxu0 0.0
    %870 = vmatpush1.msra.mxu0 0.0
    %871 = vmatprep.subr.mxu0 0.0
    %872 = vmatpush1.msra.mxu0 0.0
    %873 = vmatprep.subr.mxu0 0.0
    %874 = vmatpush1.msra.mxu0 0.0
    %875 = vmatprep.subr.mxu0 0.0
    %876 = vmatpush1.msra.mxu0 0.0
    %877 = vmatprep.subr.mxu0 0.0
    %878 = vmatpush1.msra.mxu0 0.0
    %879 = vmatprep.subr.mxu0 0.0
    %880 = vmatpush1.msra.mxu0 %v90
    %881 = vmatprep.subr.mxu0 0.0
    %882 = vmatpush2.msra.mxu0 0.0
    %883 = vmatprep.subr.mxu0 0.0
    %884 = vmatpush2.msra.mxu0 0.0
    %885 = vmatprep.subr.mxu0 0.0
    %886 = vmatpush2.msra.mxu0 0.0
    %887 = vmatprep.subr.mxu0 0.0
    %888 = vmatpush2.msra.mxu0 0.0
    %889 = vmatprep.subr.mxu0 0.0
    %890 = vmatpush2.msra.mxu0 0.0
    %891 = vmatprep.subr.mxu0 0.0
    %892 = vmatpush2.msra.mxu0 0.0
    %893 = vmatprep.subr.mxu0 0.0
    %894 = vmatpush2.msra.mxu0 0.0
    %895 = vmatprep.subr.mxu0 0.0
    %896 = vmatpush2.msra.mxu0 0.0
    %897 = vmatprep.subr.mxu0 0.0
    %898 = vmatpush2.msra.mxu0 0.0
    %899 = vmatprep.subr.mxu0 0.0
    %900 = vmatpush2.msra.mxu0 0.0
    %901 = vmatprep.subr.mxu0 0.0
    %902 = vmatpush2.msra.mxu0 0.0
    %903 = vmatprep.subr.mxu0 0.0
    %904 = vmatpush2.msra.mxu0 0.0
    %905 = vmatprep.subr.mxu0 0.0
    %906 = vmatpush2.msra.mxu0 0.0
    %907 = vmatprep.subr.mxu0 0.0
    %908 = vmatpush2.msra.mxu0 0.0
    %909 = vmatprep.subr.mxu0 0.0
    %910 = vmatpush2.msra.mxu0 0.0
    %911 = vmatprep.subr.mxu0 0.0
    %912 = vmatpush2.msra.mxu0 0.0
    %913 = vmatprep.mubr.f32.mxu0 0.0
    %914 = vmatmul.mubr.f32.gmra.mxu0 %v847
    %v915 = vpop.f32.mrf.mxu0
    %v916 = vadd.f32 0.0, %v915
    %v917 = vpop.f32.mrf.mxu0
    %918 = vdwg.mxu0
    %v919 = vsel %vm355, %v414, 0
    %921 = vmatprep.subr.mxu0 0.0
    %922 = vmatpush1.msra.mxu0 0.0
    %923 = vmatprep.subr.mxu0 0.0
    %924 = vmatpush1.msra.mxu0 0.0
    %925 = vmatprep.subr.mxu0 0.0
    %926 = vmatpush1.msra.mxu0 0.0
    %927 = vmatprep.subr.mxu0 0.0
    %928 = vmatpush1.msra.mxu0 0.0
    %929 = vmatprep.subr.mxu0 0.0
    %930 = vmatpush1.msra.mxu0 0.0
    %931 = vmatprep.subr.mxu0 0.0
    %932 = vmatpush1.msra.mxu0 0.0
    %933 = vmatprep.subr.mxu0 0.0
    %934 = vmatpush1.msra.mxu0 0.0
    %935 = vmatprep.subr.mxu0 0.0
    %936 = vmatpush1.msra.mxu0 0.0
    %937 = vmatprep.subr.mxu0 0.0
    %938 = vmatpush1.msra.mxu0 0.0
    %939 = vmatprep.subr.mxu0 0.0
    %940 = vmatpush1.msra.mxu0 0.0
    %941 = vmatprep.subr.mxu0 0.0
    %942 = vmatpush1.msra.mxu0 0.0
    %943 = vmatprep.subr.mxu0 0.0
    %944 = vmatpush1.msra.mxu0 0.0
    %945 = vmatprep.subr.mxu0 0.0
    %946 = vmatpush1.msra.mxu0 0.0
    %947 = vmatprep.subr.mxu0 0.0
    %948 = vmatpush1.msra.mxu0 0.0
    %949 = vmatprep.subr.mxu0 0.0
    %950 = vmatpush1.msra.mxu0 0.0
    %951 = vmatprep.subr.mxu0 0.0
    %952 = vmatpush1.msra.mxu0 %v91
    %953 = vmatprep.subr.mxu0 0.0
    %954 = vmatpush2.msra.mxu0 0.0
    %955 = vmatprep.subr.mxu0 0.0
    %956 = vmatpush2.msra.mxu0 0.0
    %957 = vmatprep.subr.mxu0 0.0
    %958 = vmatpush2.msra.mxu0 0.0
    %959 = vmatprep.subr.mxu0 0.0
    %960 = vmatpush2.msra.mxu0 0.0
    %961 = vmatprep.subr.mxu0 0.0
    %962 = vmatpush2.msra.mxu0 0.0
    %963 = vmatprep.subr.mxu0 0.0
    %964 = vmatpush2.msra.mxu0 0.0
    %965 = vmatprep.subr.mxu0 0.0
    %966 = vmatpush2.msra.mxu0 0.0
    %967 = vmatprep.subr.mxu0 0.0
    %968 = vmatpush2.msra.mxu0 0.0
    %969 = vmatprep.subr.mxu0 0.0
    %970 = vmatpush2.msra.mxu0 0.0
    %971 = vmatprep.subr.mxu0 0.0
    %972 = vmatpush2.msra.mxu0 0.0
    %973 = vmatprep.subr.mxu0 0.0
    %974 = vmatpush2.msra.mxu0 0.0
    %975 = vmatprep.subr.mxu0 0.0
    %976 = vmatpush2.msra.mxu0 0.0
    %977 = vmatprep.subr.mxu0 0.0
    %978 = vmatpush2.msra.mxu0 0.0
    %979 = vmatprep.subr.mxu0 0.0
    %980 = vmatpush2.msra.mxu0 0.0
    %981 = vmatprep.subr.mxu0 0.0
    %982 = vmatpush2.msra.mxu0 0.0
    %983 = vmatprep.subr.mxu0 0.0
    %984 = vmatpush2.msra.mxu0 0.0
    %985 = vmatprep.mubr.f32.mxu0 0.0
    %986 = vmatmul.mubr.f32.gmra.mxu0 %v919
    %v987 = vpop.f32.mrf.mxu0
    %v988 = vadd.f32 0.0, %v987
    %v989 = vpop.f32.mrf.mxu0
    %990 = vdwg.mxu0
    %v991 = vrcp.pop %v364
    %v993 = vrot.slane %v991, 1
    %v994 = vrot.slane %v991, 2
    %v995 = vrot.slane %v991, 3
    %v996 = vrot.slane %v991, 4
    %v997 = vrot.slane %v991, 5
    %v998 = vrot.slane %v991, 6
    %v999 = vrot.slane %v991, 7
    %v1008 = vmul.f32 %v484, %v991
    %v1009 = vmul.f32 %v556, %v993
    %v1010 = vmul.f32 %v628, %v994
    %v1011 = vmul.f32 %v700, %v995
    %v1012 = vmul.f32 %v772, %v996
    %v1013 = vmul.f32 %v844, %v997
    %v1014 = vmul.f32 %v916, %v998
    %v1015 = vmul.f32 %v988, %v999
    %v1017 = vlaneseq
    %v1018 = vshrl.u32 %v1017, 7
    %v1019 = vsub.s32 0, %v1018
    %v1020 = vrot.slane %v104, %v1019
    %v1030 = vrot.slane %v1009, 7
    %v1031 = vsel %vm339, %v1030, %v1008
    %v1032 = vrot.slane %v1010, 6
    %v1033 = vsel %vm341, %v1032, %v1031
    %v1034 = vrot.slane %v1011, 5
    %v1035 = vsel %vm343, %v1034, %v1033
    %v1036 = vrot.slane %v1012, 4
    %v1037 = vsel %vm345, %v1036, %v1035
    %v1038 = vrot.slane %v1013, 3
    %v1039 = vsel %vm347, %v1038, %v1037
    %v1040 = vrot.slane %v1014, 2
    %v1041 = vsel %vm349, %v1040, %v1039
    %v1042 = vrot.slane %v1015, 1
    %v1043 = vsel %vm351, %v1042, %v1041
    %v1044 = vsel %vm111, %v1043, 0
    %1046 = vmatprep.subr.mxu0 0.0
    %1047 = vmatpush1.msra.mxu0 0.0
    %1048 = vmatprep.subr.mxu0 0.0
    %1049 = vmatpush1.msra.mxu0 0.0
    %1050 = vmatprep.subr.mxu0 0.0
    %1051 = vmatpush1.msra.mxu0 0.0
    %1052 = vmatprep.subr.mxu0 0.0
    %1053 = vmatpush1.msra.mxu0 0.0
    %1054 = vmatprep.subr.mxu0 0.0
    %1055 = vmatpush1.msra.mxu0 0.0
    %1056 = vmatprep.subr.mxu0 0.0
    %1057 = vmatpush1.msra.mxu0 0.0
    %1058 = vmatprep.subr.mxu0 0.0
    %1059 = vmatpush1.msra.mxu0 0.0
    %1060 = vmatprep.subr.mxu0 0.0
    %1061 = vmatpush1.msra.mxu0 0.0
    %1062 = vmatprep.subr.mxu0 0.0
    %1063 = vmatpush1.msra.mxu0 0.0
    %1064 = vmatprep.subr.mxu0 0.0
    %1065 = vmatpush1.msra.mxu0 0.0
    %1066 = vmatprep.subr.mxu0 0.0
    %1067 = vmatpush1.msra.mxu0 0.0
    %1068 = vmatprep.subr.mxu0 0.0
    %1069 = vmatpush1.msra.mxu0 0.0
    %1070 = vmatprep.subr.mxu0 0.0
    %1071 = vmatpush1.msra.mxu0 %v103
    %1072 = vmatprep.subr.mxu0 0.0
    %1073 = vmatpush1.msra.mxu0 %v102
    %1074 = vmatprep.subr.mxu0 0.0
    %1075 = vmatpush1.msra.mxu0 %v101
    %1076 = vmatprep.subr.mxu0 0.0
    %1077 = vmatpush1.msra.mxu0 %v100
    %1078 = vmatprep.subr.mxu0 0.0
    %1079 = vmatpush2.msra.mxu0 0.0
    %1080 = vmatprep.subr.mxu0 0.0
    %1081 = vmatpush2.msra.mxu0 0.0
    %1082 = vmatprep.subr.mxu0 0.0
    %1083 = vmatpush2.msra.mxu0 0.0
    %1084 = vmatprep.subr.mxu0 0.0
    %1085 = vmatpush2.msra.mxu0 0.0
    %1086 = vmatprep.subr.mxu0 0.0
    %1087 = vmatpush2.msra.mxu0 0.0
    %1088 = vmatprep.subr.mxu0 0.0
    %1089 = vmatpush2.msra.mxu0 0.0
    %1090 = vmatprep.subr.mxu0 0.0
    %1091 = vmatpush2.msra.mxu0 0.0
    %1092 = vmatprep.subr.mxu0 0.0
    %1093 = vmatpush2.msra.mxu0 0.0
    %1094 = vmatprep.subr.mxu0 0.0
    %1095 = vmatpush2.msra.mxu0 0.0
    %1096 = vmatprep.subr.mxu0 0.0
    %1097 = vmatpush2.msra.mxu0 0.0
    %1098 = vmatprep.subr.mxu0 0.0
    %1099 = vmatpush2.msra.mxu0 0.0
    %1100 = vmatprep.subr.mxu0 0.0
    %1101 = vmatpush2.msra.mxu0 0.0
    %1102 = vmatprep.subr.mxu0 0.0
    %1103 = vmatpush2.msra.mxu0 0.0
    %1104 = vmatprep.subr.mxu0 0.0
    %1105 = vmatpush2.msra.mxu0 0.0
    %1106 = vmatprep.subr.mxu0 0.0
    %1107 = vmatpush2.msra.mxu0 0.0
    %1108 = vmatprep.subr.mxu0 0.0
    %1109 = vmatpush2.msra.mxu0 0.0
    %1110 = vmatprep.mubr.f32.mxu0 0.0
    %1111 = vmatmul.mubr.f32.gmra.mxu0 %v1044
    %v1112 = vpop.f32.mrf.mxu0
    %v1113 = vadd.f32 %v1020, %v1112
    %v1114 = vpop.f32.mrf.mxu0
    %1115 = vdwg.mxu0
    %v1116 = vtanh.pop %v1113
    %1117 = vst [vmem:[#allocation11] sm:$0xff] %v1116
    // Predicated region
    $region50: #{tpu_custom_call.1} parent=1 // pred_check
      _
    $region51: #{tpu_custom_call.1} parent=1 // pred_check_branch
      %1119 = sbr.rel (0) target = $region53
    $region52: #{tpu_custom_call.1} parent=1 // pred_region
      %s1121 = ssub.s32 128, 128
      %1122 = vsyncadd [#allocation5], %s1121
      %s1124 = sshll.u32 [#allocation11], 4
      %s1125 = int_to_ptr.vmem [resolvable:$true] %s1124
      %1127 = dma.vmem_to_hbm [thread:$0]  %s1125, 128, %s8, [#allocation5]
    $region53: #{tpu_custom_call.1} parent=1 // pred_fallthru
      _
    // Predicated region
    $region54: #{tpu_custom_call.1} parent=1 // pred_check
      _
    $region55: #{tpu_custom_call.1} parent=1 // pred_check_branch
      %1129 = sbr.rel (0) target = $region57
    $region56: #{tpu_custom_call.1} parent=1 // pred_region
      %1130 = dma.done [#allocation5], 128
    $region57: #{tpu_custom_call.1} parent=1 // pred_fallthru
      _
    %1131 = vsyncpa [#allocation4], 1
    %1132 = vsyncpa [#allocation7], 1
    %1133 = vsyncpa [#allocation10], 1
    %1134 = vsyncpa [#allocation5], 1

</llo_original>
